<compile_context>
chip_gen: v5e
topology: v5e:2x2
jax: 0.10.0
libtpu: 0.0.40
codegen_flags: <defaults>
</compile_context>

<pallas_src>
import functools

import jax
import jax.numpy as jnp
from jax.experimental import pallas as pl
from jax.experimental.pallas import tpu as pltpu


def _round_up(n, m):
    return ((n + m - 1) // m) * m


def _sublane_multiple(dtype):
    # 8 for f32, 16 for bf16, 32 for 8-bit dtypes.
    return max(8, 32 // dtype.itemsize)


@functools.lru_cache(maxsize=1)
def _vmem_capacity_bytes():
    try:
        info = pltpu.get_tpu_info()
        for name in ("vmem_capacity_bytes", "vmem_size_bytes", "vmem_bytes"):
            cap = getattr(info, name, None)
            if cap:
                return int(cap)
    except Exception:
        pass
    return 64 << 20  # conservative fallback: v7x per-TensorCore VMEM


def _pick_tm(rows, sublane, tile_rows):
    """Row tile: large for MXU density, bounded padding waste, >=2 tiles for megacore."""
    tm = max(min(tile_rows, _round_up(rows, sublane)), sublane)
    tm = _round_up(tm, sublane)
    while tm > sublane:
        padded = _round_up(rows, tm)
        if (padded - rows) * 8 <= padded:  # waste <= 12.5%
            break
        tm = max(_round_up(tm // 2, sublane), sublane)
    # Prefer >= 2 row tiles so both v7x TensorCores get work on the parallel axis.
    if rows > sublane and _round_up(rows, tm) // tm < 2 and tm > sublane:
        tm = max(_round_up(tm // 2, sublane), sublane)
    return tm


def _ffn_resident_kernel(x_ref, w1_ref, b1_ref, w2_ref, b2_ref, o_ref, *acc,
                         tk, n_k):
    """Weight-resident path: full d_ff reduction in one grid step.

    W1/W2 have constant block indices, so they are DMA'd from HBM exactly once
    and reused by every row tile. The reduction is a short, statically unrolled
    loop over 128-aligned d_ff chunks to keep the f32 hidden slice small.
    """
    acc_ref = acc[0] if acc else o_ref  # f32 outputs accumulate directly in o_ref
    acc_ref[...] = jnp.zeros_like(acc_ref)
    for k in range(n_k):  # n_k is a small static Python int (static slices only)
        lo, hi = k * tk, (k + 1) * tk
        h = jnp.dot(x_ref[...], w1_ref[:, lo:hi],
                    preferred_element_type=jnp.float32)
        h = jnp.maximum(h + b1_ref[:, lo:hi], 0.0)  # ReLU
        # TODO(synk): dropout is identity (eval mode); training-mode dropout would
        # use pltpu.prng_seed + pltpu.stateful_bernoulli and rescale by 1/(1-p).
        acc_ref[...] += jnp.dot(h.astype(x_ref.dtype), w2_ref[lo:hi, :],
                                preferred_element_type=jnp.float32)
    o_ref[...] = (acc_ref[...] + b2_ref[...]).astype(o_ref.dtype)


def _ffn_streaming_kernel(x_ref, w1_ref, b1_ref, w2_ref, b2_ref, o_ref, *acc):
    """Streaming path: grid = (row tiles, d_ff tiles); d_ff is the reduction axis."""
    acc_ref = acc[0] if acc else o_ref  # f32 outputs accumulate directly in o_ref
    k = pl.program_id(1)

    @pl.when(k == 0)
    def _init():
        acc_ref[...] = jnp.zeros_like(acc_ref)

    h = jnp.dot(x_ref[...], w1_ref[...], preferred_element_type=jnp.float32)
    h = jnp.maximum(h + b1_ref[...], 0.0)  # ReLU
    # TODO(synk): dropout is identity (eval mode).
    acc_ref[...] += jnp.dot(h.astype(x_ref.dtype), w2_ref[...],
                            preferred_element_type=jnp.float32)

    @pl.when(k == pl.num_programs(1) - 1)
    def _finalize():
        o_ref[...] = (acc_ref[...] + b2_ref[...]).astype(o_ref.dtype)


@functools.partial(jax.jit,
                   static_argnames=("tile_rows", "tile_ff", "force_streaming"))
def feed_forward_block(x, w1, b1, w2, b2, tile_rows=None, tile_ff=None,
                       force_streaming=False):
    """x: (batch, seq, d_model) -> (batch, seq, d_model).

    Computes relu(x @ W1 + b1) @ W2 + b2 with weights stored as (in, out)
    (PyTorch Linear weight transposed). Dropout is eval-mode identity.
    """
    batch, seq, d_model = x.shape
    d_ff = w1.shape[1]
    rows = batch * seq
    out_dtype = x.dtype

    x_it = x.dtype.itemsize
    w_it = w1.dtype.itemsize
    o_it = out_dtype.itemsize
    use_scratch = out_dtype != jnp.float32
    sublane = _sublane_multiple(x.dtype)

    vmem_cap = _vmem_capacity_bytes()
    budget = int(vmem_cap * 0.70)      # tile footprint budget (headroom for temps)
    vmem_limit = int(vmem_cap * 0.90)  # scoped VMEM limit handed to Mosaic

    if tile_rows is None:
        tile_rows = 1024 if budget >= (80 << 20) else 512  # big tiles on 128 MiB parts
    if tile_ff is None:
        tile_ff = 512

    tm = _pick_tm(rows, sublane, tile_rows)

    # d_ff reduction tile: full d_ff when small, otherwise a 128-aligned slice with
    # zero-padding of W1 columns / b1 / W2 rows (zero W2 rows contribute nothing).
    if d_ff <= tile_ff:
        tk = d_ff
        can_shrink_tk = False
    else:
        tk = _round_up(tile_ff, 128)
        can_shrink_tk = True
    d_ff_p = _round_up(d_ff, tk)

    def resident_bytes(tm_, tk_):
        weights = 2 * w_it * (d_model * d_ff_p + d_ff_p + d_ff_p * d_model + d_model)
        io = 2 * tm_ * d_model * (x_it + o_it)
        acc = tm_ * d_model * 4 if use_scratch else 0
        hidden = 2 * tm_ * tk_ * 4
        return weights + io + acc + hidden

    def streaming_bytes(tm_, tk_):
        io = 2 * tm_ * d_model * (x_it + o_it)
        wslices = 2 * w_it * (d_model * tk_ + tk_ + tk_ * d_model + d_model)
        acc = tm_ * d_model * 4 if use_scratch else 0
        hidden = 2 * tm_ * tk_ * 4
        return io + wslices + acc + hidden

    # --- choose execution plan ------------------------------------------------
    n_k = d_ff_p // tk
    resident = (not force_streaming) and n_k <= 64
    if resident:
        tm_r = tm
        while resident_bytes(tm_r, tk) > budget and tm_r > sublane:
            tm_r = max(_round_up(tm_r // 2, sublane), sublane)
        resident = resident_bytes(tm_r, tk) <= budget
        if resident:
            tm = tm_r
    if not resident:
        # Shrink the d_ff slice first (keeps the reduction pipelined), then rows.
        while streaming_bytes(tm, tk) > budget:
            if can_shrink_tk and tk > 128:
                tk //= 2
            elif tm > sublane:
                tm = max(_round_up(tm // 2, sublane), sublane)
            else:
                break
        n_k = d_ff_p // tk

    rows_padded = _round_up(rows, tm)

    x2d = x.reshape(rows, d_model)
    if rows_padded != rows:
        x2d = jnp.pad(x2d, ((0, rows_padded - rows), (0, 0)))

    b1_2d = b1.reshape(1, d_ff)
    b2_2d = b2.reshape(1, d_model)
    if d_ff_p != d_ff:
        pad = d_ff_p - d_ff
        w1 = jnp.pad(w1, ((0, 0), (0, pad)))
        b1_2d = jnp.pad(b1_2d, ((0, 0), (0, pad)))
        w2 = jnp.pad(w2, ((0, pad), (0, 0)))

    cost = pl.CostEstimate(
        flops=4 * rows * d_model * d_ff,
        transcendentals=0,
        bytes_accessed=(rows * d_model * (x_it + o_it)
                        + w_it * (2 * d_model * d_ff + d_ff + d_model)),
    )
    scratch = [pltpu.VMEM((tm, d_model), jnp.float32)] if use_scratch else []

    if resident:
        kernel = functools.partial(_ffn_resident_kernel, tk=tk, n_k=n_k)
        grid_spec = pltpu.PrefetchScalarGridSpec(
            num_scalar_prefetch=0,
            grid=(rows_padded // tm,),
            in_specs=[
                pl.BlockSpec((tm, d_model), lambda i: (i, 0)),       # x row tile
                pl.BlockSpec((d_model, d_ff_p), lambda i: (0, 0)),   # W1 (resident)
                pl.BlockSpec((1, d_ff_p), lambda i: (0, 0)),         # b1 (resident)
                pl.BlockSpec((d_ff_p, d_model), lambda i: (0, 0)),   # W2 (resident)
                pl.BlockSpec((1, d_model), lambda i: (0, 0)),        # b2 (resident)
            ],
            out_specs=pl.BlockSpec((tm, d_model), lambda i: (i, 0)),
            scratch_shapes=scratch,
        )
        dim_sem = ("parallel",)
    else:
        kernel = _ffn_streaming_kernel
        grid_spec = pltpu.PrefetchScalarGridSpec(
            num_scalar_prefetch=0,
            grid=(rows_padded // tm, n_k),
            in_specs=[
                pl.BlockSpec((tm, d_model), lambda i, k: (i, 0)),    # x row tile
                pl.BlockSpec((d_model, tk), lambda i, k: (0, k)),    # W1 d_ff slice
                pl.BlockSpec((1, tk),       lambda i, k: (0, k)),    # b1 d_ff slice
                pl.BlockSpec((tk, d_model), lambda i, k: (k, 0)),    # W2 d_ff slice
                pl.BlockSpec((1, d_model),  lambda i, k: (0, 0)),    # b2 (invariant)
            ],
            out_specs=pl.BlockSpec((tm, d_model), lambda i, k: (i, 0)),
            scratch_shapes=scratch,
        )
        dim_sem = ("parallel", "arbitrary")

    out = pl.pallas_call(
        kernel,
        out_shape=jax.ShapeDtypeStruct((rows_padded, d_model), out_dtype),
        grid_spec=grid_spec,
        compiler_params=pltpu.CompilerParams(
            dimension_semantics=dim_sem,
            vmem_limit_bytes=vmem_limit,
        ),
        cost_estimate=cost,
    )(x2d, w1, b1_2d, w2, b2_2d)

    if rows_padded != rows:
        out = out[:rows]
    return out.reshape(batch, seq, d_model)


def init_params(key, d_model, d_ff, dtype=jnp.float32):
    """Mimics nn.Linear defaults; weights stored as (in, out) = PyTorch weight.T."""
    k1, k2, k3, k4 = jax.random.split(key, 4)
    bound1 = 1.0 / (d_model ** 0.5)
    bound2 = 1.0 / (d_ff ** 0.5)
    w1 = jax.random.uniform(k1, (d_model, d_ff), dtype, -bound1, bound1)
    b1 = jax.random.uniform(k2, (d_ff,), dtype, -bound1, bound1)
    w2 = jax.random.uniform(k3, (d_ff, d_model), dtype, -bound2, bound2)
    b2 = jax.random.uniform(k4, (d_model,), dtype, -bound2, bound2)
    return w1, b1, w2, b2


def _reference(x, w1, b1, w2, b2):
    return jnp.maximum(x @ w1 + b1, 0.0) @ w2 + b2


if __name__ == "__main__":
    key = jax.random.PRNGKey(0)
    batch, seq, d_model, d_ff = 2, 8, 32, 256
    kx, kp, kx2 = jax.random.split(key, 3)

    x = jax.random.normal(kx, (batch, seq, d_model), jnp.float32)
    w1, b1, w2, b2 = init_params(kp, d_model, d_ff)
    ref = _reference(x, w1, b1, w2, b2)

    # 1) default: weight-resident path, single d_ff slice.
    y = jax.block_until_ready(feed_forward_block(x, w1, b1, w2, b2))
    assert y.shape == x.shape
    assert jnp.allclose(y, ref, atol=1e-5, rtol=1e-5)

    # 2) resident path with an in-kernel d_ff reduction loop (two 128-wide slices).
    y = jax.block_until_ready(feed_forward_block(x, w1, b1, w2, b2, tile_ff=128))
    assert jnp.allclose(y, ref, atol=1e-5, rtol=1e-5)

    # 3) streaming path (grid reduction over d_ff); f32 accumulates directly in o_ref.
    y = jax.block_until_ready(
        feed_forward_block(x, w1, b1, w2, b2, tile_ff=128, force_streaming=True))
    assert jnp.allclose(y, ref, atol=1e-5, rtol=1e-5)

    # 4) bf16 path (uses the f32 VMEM scratch accumulator + bf16 MXU path).
    xb = x.astype(jnp.bfloat16)
    w1b, b1b, w2b, b2b = (t.astype(jnp.bfloat16) for t in (w1, b1, w2, b2))
    yb = jax.block_until_ready(feed_forward_block(xb, w1b, b1b, w2b, b2b))
    refb = _reference(xb.astype(jnp.float32), w1b.astype(jnp.float32),
                      b1b.astype(jnp.float32), w2b.astype(jnp.float32),
                      b2b.astype(jnp.float32))
    assert yb.shape == x.shape
    assert jnp.allclose(yb.astype(jnp.float32), refb, atol=5e-2, rtol=5e-2)

    # 5) row count not a multiple of the sublane tile (padding path).
    x2 = jax.random.normal(kx2, (1, 5, d_model), jnp.float32)
    y2 = jax.block_until_ready(feed_forward_block(x2, w1, b1, w2, b2))
    assert y2.shape == (1, 5, d_model)
    assert jnp.allclose(y2, _reference(x2, w1, b1, w2, b2), atol=1e-5, rtol=1e-5)

    print("KERNEL_OK")
</pallas_src>

<mosaic_0001>
module attributes {stable_mosaic.version = 11 : i64} {
  func.func @_ffn_resident_kernel(%arg0: i32, %arg1: memref<8x32xf32, #tpu.memory_space<vmem>>, %arg2: memref<32x256xf32, #tpu.memory_space<vmem>>, %arg3: memref<1x256xf32, #tpu.memory_space<vmem>>, %arg4: memref<256x32xf32, #tpu.memory_space<vmem>>, %arg5: memref<1x32xf32, #tpu.memory_space<vmem>>, %arg6: memref<8x32xf32, #tpu.memory_space<vmem>>) attributes {dimension_semantics = [#tpu.dimension_semantics<parallel>], iteration_bounds = array<i64: 2>, scalar_prefetch = 0 : i64, scratch_operands = 0 : i64, tpu.core_type = #tpu.core_type<tc>, window_params = [{transform_indices = @transform_0, window_bounds = array<i64: 8, 32>}, {pipeline_mode = #tpu.pipeline_mode<synchronous>, transform_indices = @transform_1, window_bounds = array<i64: 32, 256>}, {pipeline_mode = #tpu.pipeline_mode<synchronous>, transform_indices = @transform_2, window_bounds = array<i64: 1, 256>}, {pipeline_mode = #tpu.pipeline_mode<synchronous>, transform_indices = @transform_3, window_bounds = array<i64: 256, 32>}, {pipeline_mode = #tpu.pipeline_mode<synchronous>, transform_indices = @transform_4, window_bounds = array<i64: 1, 32>}, {transform_indices = @transform_5, window_bounds = array<i64: 8, 32>}]} {
    %cst = arith.constant 0.000000e+00 : f32
    %0 = vector.broadcast %cst : f32 to vector<8x32xf32>
    %c0 = arith.constant 0 : index
    %c0_0 = arith.constant 0 : index
    %1 = vector.load %arg6[%c0, %c0_0] : memref<8x32xf32, #tpu.memory_space<vmem>>, vector<8x32xf32>
    tpu.vector_store %arg6[%c0, %c0_0], %0 {strides = array<i32>} : memref<8x32xf32, #tpu.memory_space<vmem>>, vector<8x32xf32>,
    %c0_1 = arith.constant 0 : index
    %c0_2 = arith.constant 0 : index
    %2 = vector.load %arg1[%c0_1, %c0_2] : memref<8x32xf32, #tpu.memory_space<vmem>>, vector<8x32xf32>
    %c0_3 = arith.constant 0 : index
    %c0_4 = arith.constant 0 : index
    %3 = vector.load %arg2[%c0_3, %c0_4] : memref<32x256xf32, #tpu.memory_space<vmem>>, vector<32x256xf32>
    %cst_5 = arith.constant dense<0.000000e+00> : vector<8x256xf32>
    %4 = tpu.matmul %2, %3, %cst_5 {dimension_numbers = #tpu.dot_dimension_numbers<[1], [0], [0], [1], [0, 0, 1, 1], [], []>} : vector<8x32xf32>, vector<32x256xf32>, vector<8x256xf32> -> vector<8x256xf32>
    %c0_6 = arith.constant 0 : index
    %c0_7 = arith.constant 0 : index
    %5 = vector.load %arg3[%c0_6, %c0_7] : memref<1x256xf32, #tpu.memory_space<vmem>>, vector<1x256xf32>
    %6 = vector.broadcast %5 : vector<1x256xf32> to vector<8x256xf32>
    %7 = arith.addf %4, %6 : vector<8x256xf32>
    %cst_8 = arith.constant 0.000000e+00 : f32
    %8 = vector.broadcast %cst_8 : f32 to vector<8x256xf32>
    %9 = arith.maximumf %7, %8 : vector<8x256xf32>
    %c0_9 = arith.constant 0 : index
    %c0_10 = arith.constant 0 : index
    %10 = vector.load %arg6[%c0_9, %c0_10] : memref<8x32xf32, #tpu.memory_space<vmem>>, vector<8x32xf32>
    %c0_11 = arith.constant 0 : index
    %c0_12 = arith.constant 0 : index
    %11 = vector.load %arg4[%c0_11, %c0_12] : memref<256x32xf32, #tpu.memory_space<vmem>>, vector<256x32xf32>
    %cst_13 = arith.constant dense<0.000000e+00> : vector<8x32xf32>
    %12 = tpu.matmul %9, %11, %cst_13 {dimension_numbers = #tpu.dot_dimension_numbers<[1], [0], [0], [1], [0, 0, 1, 1], [], []>} : vector<8x256xf32>, vector<256x32xf32>, vector<8x32xf32> -> vector<8x32xf32>
    %13 = arith.addf %10, %12 : vector<8x32xf32>
    %c0_14 = arith.constant 0 : index
    %c0_15 = arith.constant 0 : index
    %14 = vector.load %arg6[%c0_14, %c0_15] : memref<8x32xf32, #tpu.memory_space<vmem>>, vector<8x32xf32>
    tpu.vector_store %arg6[%c0_14, %c0_15], %13 {strides = array<i32>} : memref<8x32xf32, #tpu.memory_space<vmem>>, vector<8x32xf32>,
    %c0_16 = arith.constant 0 : index
    %c0_17 = arith.constant 0 : index
    %15 = vector.load %arg6[%c0_16, %c0_17] : memref<8x32xf32, #tpu.memory_space<vmem>>, vector<8x32xf32>
    %c0_18 = arith.constant 0 : index
    %c0_19 = arith.constant 0 : index
    %16 = vector.load %arg5[%c0_18, %c0_19] : memref<1x32xf32, #tpu.memory_space<vmem>>, vector<1x32xf32>
    %17 = vector.broadcast %16 : vector<1x32xf32> to vector<8x32xf32>
    %18 = arith.addf %15, %17 : vector<8x32xf32>
    %c0_20 = arith.constant 0 : index
    %c0_21 = arith.constant 0 : index
    %19 = vector.load %arg6[%c0_20, %c0_21] : memref<8x32xf32, #tpu.memory_space<vmem>>, vector<8x32xf32>
    tpu.vector_store %arg6[%c0_20, %c0_21], %18 {strides = array<i32>} : memref<8x32xf32, #tpu.memory_space<vmem>>, vector<8x32xf32>,
    return
  }
  func.func @transform_0(%arg0: i32) -> (i32, i32) {
    %c0_i32 = arith.constant 0 : i32
    %c0_i32_0 = arith.constant 0 : i32
    return %arg0, %c0_i32 : i32, i32
  }
  func.func @transform_1(%arg0: i32) -> (i32, i32) {
    %c0_i32 = arith.constant 0 : i32
    %c0_i32_0 = arith.constant 0 : i32
    %c0_i32_1 = arith.constant 0 : i32
    return %c0_i32, %c0_i32_0 : i32, i32
  }
  func.func @transform_2(%arg0: i32) -> (i32, i32) {
    %c0_i32 = arith.constant 0 : i32
    %c0_i32_0 = arith.constant 0 : i32
    %c0_i32_1 = arith.constant 0 : i32
    return %c0_i32, %c0_i32_0 : i32, i32
  }
  func.func @transform_3(%arg0: i32) -> (i32, i32) {
    %c0_i32 = arith.constant 0 : i32
    %c0_i32_0 = arith.constant 0 : i32
    %c0_i32_1 = arith.constant 0 : i32
    return %c0_i32, %c0_i32_0 : i32, i32
  }
  func.func @transform_4(%arg0: i32) -> (i32, i32) {
    %c0_i32 = arith.constant 0 : i32
    %c0_i32_0 = arith.constant 0 : i32
    %c0_i32_1 = arith.constant 0 : i32
    return %c0_i32, %c0_i32_0 : i32, i32
  }
  func.func @transform_5(%arg0: i32) -> (i32, i32) {
    %c0_i32 = arith.constant 0 : i32
    %c0_i32_0 = arith.constant 0 : i32
    return %arg0, %c0_i32 : i32, i32
  }
}

</mosaic_0001>

<llo_original>
// kernel: feed_forward_block.1
$region0: #{feed_forward_block.1}
  #allocation0 [shape = 'u32[]', space=smem, size = 0x4, offset = 0x4, fixed_abs, tag = 'smem constant byte address 0x4 - core index']
  #allocation1 [shape = 'u32[72,128]{1,0:T(1,128)}', space=vmem, size = 0x9000, scoped, tag = 'internal scratch']
  %s0 = inlined_call_operand.vmem [shape: f32[16,32], index: 0, kind: input, shape index: {}]
  %s1 = inlined_call_operand.vmem [shape: f32[32,256], index: 1, kind: input, shape index: {}]
  %s2 = inlined_call_operand.vmem [shape: f32[1,256], index: 2, kind: input, shape index: {}]
  %s3 = inlined_call_operand.vmem [shape: f32[256,32], index: 3, kind: input, shape index: {}]
  %s4 = inlined_call_operand.vmem [shape: f32[1,32], index: 4, kind: input, shape index: {}]
  %s5 = inlined_call_operand.hbm [shape: f32[16,32], index: 5, kind: output, shape index: {}]
  %s6 = sld [smem:[#allocation0]]
  $region53: #{feed_forward_block.1} parent=0
    _
  %s8 = ssub.s32 1, %s6
  %s9 = scalar_select 0, %s8, %s6
  $region1: #{feed_forward_block.1} parent=0
    #allocation2 [shape = 'u8[8192]{0}', space=vmem, size = 0x2000, scoped, tag = 'output window, operand 0']
    #allocation3 [shape = 's32[2]{0}', space=sflag, size = 0x8, scoped, tag = 'scoped memory for feed_forward_block.1']
    %10 = vsyncpa [#allocation3], 0
    %s11 = scalar_lea.sflag [#allocation3], 1
    %12 = vsyncpa %s11, 0
    loop: start=0, step=1, limit=4
    $region2: #{feed_forward_block.1} parent=1 // loop_pre_header
      _
    $region3: #{feed_forward_block.1} parent=1 // loop_header
      %s14 = sphi 0, %s18
      %p15 = scmp.ge.s32.totalorder %s14, 4
      %s24 = sphi 0, %s26
      %s27 = sphi 0, %s24
      %s28 = sphi 0, %s27
      %s44 = sphi 0, %s28
      %s48 = sphi 0, %s48
      %s50 = sphi 0, %s48
      %s51 = sphi 0, %s50
      %s65 = sphi 0, %s51
      %s69 = sphi 0, %s69
      %s71 = sphi 0, %s69
      %s72 = sphi 0, %s71
      %s86 = sphi 0, %s72
      %s90 = sphi 0, %s90
      %s92 = sphi 0, %s90
      %s93 = sphi 0, %s92
      %s107 = sphi 0, %s93
      %s111 = sphi 0, %s111
      %s113 = sphi 0, %s111
      %s114 = sphi 0, %s113
      %s128 = sphi 0, %s114
      %s134 = sphi 0, %s136
      %s137 = sphi 0, %s134
      %s138 = sphi 0, %s137
      %s154 = sphi 0, %s138
    $region4: #{feed_forward_block.1} parent=1 // loop_header_branch
      %17 = sbr.rel (%p15) target = $region8
    $region5: #{feed_forward_block.1} parent=1 // loop_body
      %s19 = ssub.s32 %s14, 1
      %s20 = ssub.s32 %s14, 2
      %s21 = sadd.s32 %s14, 1
      %s22 = ssub.s32 %s14, %s21
      %p23 = scmp.eq.s32.totalorder %s22, 0
      %s25 = sadd.s32 %s24, 1
      %s26 = scalar_select %p23, %s24, %s25
      %p29 = pneg %p23
      %p30 = scmp.eq.s32.totalorder %s14, 1
      %p31 = por %p29, %p30
      %p32 = scmp.ne.s32.totalorder %s24, %s27
      %p33 = scmp.eq.s32.totalorder %s14, 0
      %p34 = por %p32, %p33
      %p35 = scmp.ne.s32.totalorder %s24, %s27
      %p36 = scmp.eq.s32.totalorder %s19, 1
      %p37 = por %p35, %p36
      %p38 = scmp.ne.s32.totalorder %s27, %s28
      %p39 = scmp.eq.s32.totalorder %s19, 0
      %p40 = por %p38, %p39
      %p41 = scmp.ne.s32.totalorder %s27, %s28
      %p42 = scmp.eq.s32.totalorder %s20, 1
      %p43 = por %p41, %p42
      %p45 = scmp.ne.s32.totalorder %s28, %s44
      %p46 = scmp.eq.s32.totalorder %s20, 0
      %p47 = por %p45, %p46
      %s49 = sadd.s32 %s48, 1
      %p52 = scmp.eq.s32.totalorder %s14, 1
      %p53 = scmp.ne.s32.totalorder %s48, %s50
      %p54 = scmp.eq.s32.totalorder %s14, 0
      %p55 = por %p53, %p54
      %p56 = scmp.ne.s32.totalorder %s48, %s50
      %p57 = scmp.eq.s32.totalorder %s19, 1
      %p58 = por %p56, %p57
      %p59 = scmp.ne.s32.totalorder %s50, %s51
      %p60 = scmp.eq.s32.totalorder %s19, 0
      %p61 = por %p59, %p60
      %p62 = scmp.ne.s32.totalorder %s50, %s51
      %p63 = scmp.eq.s32.totalorder %s20, 1
      %p64 = por %p62, %p63
      %p66 = scmp.ne.s32.totalorder %s51, %s65
      %p67 = scmp.eq.s32.totalorder %s20, 0
      %p68 = por %p66, %p67
      %s70 = sadd.s32 %s69, 1
      %p73 = scmp.eq.s32.totalorder %s14, 1
      %p74 = scmp.ne.s32.totalorder %s69, %s71
      %p75 = scmp.eq.s32.totalorder %s14, 0
      %p76 = por %p74, %p75
      %p77 = scmp.ne.s32.totalorder %s69, %s71
      %p78 = scmp.eq.s32.totalorder %s19, 1
      %p79 = por %p77, %p78
      %p80 = scmp.ne.s32.totalorder %s71, %s72
      %p81 = scmp.eq.s32.totalorder %s19, 0
      %p82 = por %p80, %p81
      %p83 = scmp.ne.s32.totalorder %s71, %s72
      %p84 = scmp.eq.s32.totalorder %s20, 1
      %p85 = por %p83, %p84
      %p87 = scmp.ne.s32.totalorder %s72, %s86
      %p88 = scmp.eq.s32.totalorder %s20, 0
      %p89 = por %p87, %p88
      %s91 = sadd.s32 %s90, 1
      %p94 = scmp.eq.s32.totalorder %s14, 1
      %p95 = scmp.ne.s32.totalorder %s90, %s92
      %p96 = scmp.eq.s32.totalorder %s14, 0
      %p97 = por %p95, %p96
      %p98 = scmp.ne.s32.totalorder %s90, %s92
      %p99 = scmp.eq.s32.totalorder %s19, 1
      %p100 = por %p98, %p99
      %p101 = scmp.ne.s32.totalorder %s92, %s93
      %p102 = scmp.eq.s32.totalorder %s19, 0
      %p103 = por %p101, %p102
      %p104 = scmp.ne.s32.totalorder %s92, %s93
      %p105 = scmp.eq.s32.totalorder %s20, 1
      %p106 = por %p104, %p105
      %p108 = scmp.ne.s32.totalorder %s93, %s107
      %p109 = scmp.eq.s32.totalorder %s20, 0
      %p110 = por %p108, %p109
      %s112 = sadd.s32 %s111, 1
      %p115 = scmp.eq.s32.totalorder %s14, 1
      %p116 = scmp.ne.s32.totalorder %s111, %s113
      %p117 = scmp.eq.s32.totalorder %s14, 0
      %p118 = por %p116, %p117
      %p119 = scmp.ne.s32.totalorder %s111, %s113
      %p120 = scmp.eq.s32.totalorder %s19, 1
      %p121 = por %p119, %p120
      %p122 = scmp.ne.s32.totalorder %s113, %s114
      %p123 = scmp.eq.s32.totalorder %s19, 0
      %p124 = por %p122, %p123
      %p125 = scmp.ne.s32.totalorder %s113, %s114
      %p126 = scmp.eq.s32.totalorder %s20, 1
      %p127 = por %p125, %p126
      %p129 = scmp.ne.s32.totalorder %s114, %s128
      %p130 = scmp.eq.s32.totalorder %s20, 0
      %p131 = por %p129, %p130
      %s132 = ssub.s32 %s14, %s21
      %p133 = scmp.eq.s32.totalorder %s132, 0
      %s135 = sadd.s32 %s134, 1
      %s136 = scalar_select %p133, %s134, %s135
      %p139 = pneg %p133
      %p140 = scmp.eq.s32.totalorder %s14, 1
      %p141 = por %p139, %p140
      %p142 = scmp.ne.s32.totalorder %s134, %s137
      %p143 = scmp.eq.s32.totalorder %s14, 0
      %p144 = por %p142, %p143
      %p145 = scmp.ne.s32.totalorder %s134, %s137
      %p146 = scmp.eq.s32.totalorder %s19, 1
      %p147 = por %p145, %p146
      %p148 = scmp.ne.s32.totalorder %s137, %s138
      %p149 = scmp.eq.s32.totalorder %s19, 0
      %p150 = por %p148, %p149
      %p151 = scmp.ne.s32.totalorder %s137, %s138
      %p152 = scmp.eq.s32.totalorder %s20, 1
      %p153 = por %p151, %p152
      %p155 = scmp.ne.s32.totalorder %s138, %s154
      %p156 = scmp.eq.s32.totalorder %s20, 0
      %p157 = por %p155, %p156
      %p158 = scmp.le.s32.totalorder 1, %s14
      %p159 = scmp.lt.s32.totalorder %s14, 3
      %p160 = pnand %p158, %p159
      %p161 = pneg %p160
      // Predicated region
      $region9: #{feed_forward_block.1} parent=5 // pred_check
        _
      $region10: #{feed_forward_block.1} parent=5 // pred_check_branch
        %163 = sbr.rel (%p160) target = $region12
      $region11: #{feed_forward_block.1} parent=5 // pred_region
        %s164 = ssub.s32 %s14, 1
        // Predicated region
        $region13: #{feed_forward_block.1} parent=11 // pred_check
          %p165 = pneg %p61
        $region14: #{feed_forward_block.1} parent=11 // pred_check_branch
          %167 = sbr.rel (%p165) target = $region16
        $region15: #{feed_forward_block.1} parent=11 // pred_region
          _
        $region16: #{feed_forward_block.1} parent=11 // pred_fallthru
          _
        // Predicated region
        $region17: #{feed_forward_block.1} parent=11 // pred_check
          %p168 = pneg %p82
        $region18: #{feed_forward_block.1} parent=11 // pred_check_branch
          %170 = sbr.rel (%p168) target = $region20
        $region19: #{feed_forward_block.1} parent=11 // pred_region
          _
        $region20: #{feed_forward_block.1} parent=11 // pred_fallthru
          _
        // Predicated region
        $region21: #{feed_forward_block.1} parent=11 // pred_check
          %p171 = pneg %p103
        $region22: #{feed_forward_block.1} parent=11 // pred_check_branch
          %173 = sbr.rel (%p171) target = $region24
        $region23: #{feed_forward_block.1} parent=11 // pred_region
          _
        $region24: #{feed_forward_block.1} parent=11 // pred_fallthru
          _
        // Predicated region
        $region25: #{feed_forward_block.1} parent=11 // pred_check
          %p174 = pneg %p124
        $region26: #{feed_forward_block.1} parent=11 // pred_check_branch
          %176 = sbr.rel (%p174) target = $region28
        $region27: #{feed_forward_block.1} parent=11 // pred_region
          _
        $region28: #{feed_forward_block.1} parent=11 // pred_fallthru
          _
      $region12: #{feed_forward_block.1} parent=5 // pred_fallthru
        _
      %p177 = scmp.lt.s32.totalorder %s14, 2
      // Predicated region
      $region29: #{feed_forward_block.1} parent=5 // pred_check
        %p178 = pneg %p177
      $region30: #{feed_forward_block.1} parent=5 // pred_check_branch
        %180 = sbr.rel (%p178) target = $region32
      $region31: #{feed_forward_block.1} parent=5 // pred_region
        // Predicated region
        $region33: #{feed_forward_block.1} parent=31 // pred_check
          %p181 = pneg %p34
        $region34: #{feed_forward_block.1} parent=31 // pred_check_branch
          %183 = sbr.rel (%p181) target = $region36
        $region35: #{feed_forward_block.1} parent=31 // pred_region
          %p184 = scmp.lt.s32.totalorder %s14, 1
          %s185 = scalar_select %p184, %s14, 1
          %s186 = smul.addr %s185, 8
          %s187 = scalar_lea.vmem %s0, %s186
        $region36: #{feed_forward_block.1} parent=31 // pred_fallthru
          _
      $region32: #{feed_forward_block.1} parent=5 // pred_fallthru
        _
      %p188 = scmp.le.s32.totalorder 1, %s14
      %p189 = scmp.lt.s32.totalorder %s14, 3
      %p190 = pnand %p188, %p189
      %p191 = pneg %p190
      // Predicated region
      $region37: #{feed_forward_block.1} parent=5 // pred_check
        _
      $region38: #{feed_forward_block.1} parent=5 // pred_check_branch
        %193 = sbr.rel (%p190) target = $region40
      $region39: #{feed_forward_block.1} parent=5 // pred_region
        %s194 = ssub.s32 %s14, 1
        %p195 = scmp.lt.s32.totalorder %s19, 1
        %s196 = scalar_select %p195, %s19, 1
        %s197 = smul.addr %s196, 8
        %s198 = scalar_lea.vmem %s0, %s197
        %p199 = pneg %p40
        %p200 = pneg %p37
        %p201 = pneg %p61
        %p202 = pneg %p58
        %p203 = pneg %p82
        %p204 = pneg %p79
        %p205 = pneg %p103
        %p206 = pneg %p100
        %p207 = pneg %p124
        %p208 = pneg %p121
        %p209 = pneg %p150
        %p210 = pneg %p147
        %s211 = sand.u32 %s137, 1
        %s212 = scalar_lea.sflag [#allocation3], %s211
        %s213 = sand.u32 %s137, 1
        %s214 = smul.addr %s213, 8
        %s215 = scalar_lea.vmem [#allocation2], %s214
        %p216 = scmp.lt.s32.totalorder %s19, 1
        %s217 = scalar_select %p216, %s19, 1
        %s218 = smul.addr %s217, 8
        %s219 = scalar_lea.vmem %s0, %s218
        %vm220 = vcmask 261120
        %221 = vst.msk [vmem:[%s215] sm:$0xff] %vm220, 0.0
        %v222 = vld [vmem:[%s219] sm:$0xff]
        %v223 = vld [vmem:[%s1] sm:$0xff]
        %v224 = vld [vmem:[%s1 + $0x8] sm:$0xff]
        %v225 = vld [vmem:[%s1 + $0x10] sm:$0xff]
        %v226 = vld [vmem:[%s1 + $0x18] sm:$0xff]
        %v227 = vld [vmem:[%s1 + $0x20] sm:$0xff]
        %v228 = vld [vmem:[%s1 + $0x28] sm:$0xff]
        %v229 = vld [vmem:[%s1 + $0x30] sm:$0xff]
        %v230 = vld [vmem:[%s1 + $0x38] sm:$0xff]
        %v231 = vld [vmem:[%s2] sm:$0x3]
        %v233 = vperm.slane %v231, 0
        %v234 = vperm.slane %v231, 1
        %v238 = vsel %vm220, %v222, 0
        %240 = vmatpush.msra.mxu0 0.0
        %241 = vmatpush.msra.mxu0 0.0
        %242 = vmatpush.msra.mxu0 0.0
        %243 = vmatpush.msra.mxu0 0.0
        %244 = vmatpush.msra.mxu0 0.0
        %245 = vmatpush.msra.mxu0 0.0
        %246 = vmatpush.msra.mxu0 0.0
        %247 = vmatpush.msra.mxu0 0.0
        %248 = vmatpush.msra.mxu0 0.0
        %249 = vmatpush.msra.mxu0 0.0
        %250 = vmatpush.msra.mxu0 0.0
        %251 = vmatpush.msra.mxu0 0.0
        %252 = vmatpush.msra.mxu0 %v229
        %253 = vmatpush.msra.mxu0 %v227
        %254 = vmatpush.msra.mxu0 %v225
        %255 = vmatpush.msra.mxu0 %v223
        %256 = vmatmul.f32.gmra.mxu0 %v238
        %v257 = vpop.f32.mrf.mxu0
        %v258 = vadd.f32 %v233, %v257
        %259 = vdwg.mxu0
        %260 = vmatpush.msra.mxu0 0.0
        %261 = vmatpush.msra.mxu0 0.0
        %262 = vmatpush.msra.mxu0 0.0
        %263 = vmatpush.msra.mxu0 0.0
        %264 = vmatpush.msra.mxu0 0.0
        %265 = vmatpush.msra.mxu0 0.0
        %266 = vmatpush.msra.mxu0 0.0
        %267 = vmatpush.msra.mxu0 0.0
        %268 = vmatpush.msra.mxu0 0.0
        %269 = vmatpush.msra.mxu0 0.0
        %270 = vmatpush.msra.mxu0 0.0
        %271 = vmatpush.msra.mxu0 0.0
        %272 = vmatpush.msra.mxu0 %v230
        %273 = vmatpush.msra.mxu0 %v228
        %274 = vmatpush.msra.mxu0 %v226
        %275 = vmatpush.msra.mxu0 %v224
        %276 = vmatmul.f32.gmra.mxu0 %v238
        %v277 = vpop.f32.mrf.mxu0
        %v278 = vadd.f32 %v234, %v277
        %279 = vdwg.mxu0
        %v280 = vmax.f32 %v258, 0.0
        %v281 = vmax.f32 %v278, 0.0
        %v282 = vld [vmem:[%s215] sm:$0xff]
        %v283 = vld [vmem:[%s3] sm:$0xff]
        %v284 = vld [vmem:[%s3 + $0x8] sm:$0xff]
        %v285 = vld [vmem:[%s3 + $0x10] sm:$0xff]
        %v286 = vld [vmem:[%s3 + $0x18] sm:$0xff]
        %v287 = vld [vmem:[%s3 + $0x20] sm:$0xff]
        %v288 = vld [vmem:[%s3 + $0x28] sm:$0xff]
        %v289 = vld [vmem:[%s3 + $0x30] sm:$0xff]
        %v290 = vld [vmem:[%s3 + $0x38] sm:$0xff]
        %v291 = vld [vmem:[%s3 + $0x40] sm:$0xff]
        %v292 = vld [vmem:[%s3 + $0x48] sm:$0xff]
        %v293 = vld [vmem:[%s3 + $0x50] sm:$0xff]
        %v294 = vld [vmem:[%s3 + $0x58] sm:$0xff]
        %v295 = vld [vmem:[%s3 + $0x60] sm:$0xff]
        %v296 = vld [vmem:[%s3 + $0x68] sm:$0xff]
        %v297 = vld [vmem:[%s3 + $0x70] sm:$0xff]
        %v298 = vld [vmem:[%s3 + $0x78] sm:$0xff]
        %v299 = vld [vmem:[%s3 + $0x80] sm:$0xff]
        %v300 = vld [vmem:[%s3 + $0x88] sm:$0xff]
        %v301 = vld [vmem:[%s3 + $0x90] sm:$0xff]
        %v302 = vld [vmem:[%s3 + $0x98] sm:$0xff]
        %v303 = vld [vmem:[%s3 + $0xa0] sm:$0xff]
        %v304 = vld [vmem:[%s3 + $0xa8] sm:$0xff]
        %v305 = vld [vmem:[%s3 + $0xb0] sm:$0xff]
        %v306 = vld [vmem:[%s3 + $0xb8] sm:$0xff]
        %v307 = vld [vmem:[%s3 + $0xc0] sm:$0xff]
        %v308 = vld [vmem:[%s3 + $0xc8] sm:$0xff]
        %v309 = vld [vmem:[%s3 + $0xd0] sm:$0xff]
        %v310 = vld [vmem:[%s3 + $0xd8] sm:$0xff]
        %v311 = vld [vmem:[%s3 + $0xe0] sm:$0xff]
        %v312 = vld [vmem:[%s3 + $0xe8] sm:$0xff]
        %v313 = vld [vmem:[%s3 + $0xf0] sm:$0xff]
        %v314 = vld [vmem:[%s3 + $0xf8] sm:$0xff]
        %315 = vmatpush.msra.mxu0 %v298
        %316 = vmatpush.msra.mxu0 %v297
        %317 = vmatpush.msra.mxu0 %v296
        %318 = vmatpush.msra.mxu0 %v295
        %319 = vmatpush.msra.mxu0 %v294
        %320 = vmatpush.msra.mxu0 %v293
        %321 = vmatpush.msra.mxu0 %v292
        %322 = vmatpush.msra.mxu0 %v291
        %323 = vmatpush.msra.mxu0 %v290
        %324 = vmatpush.msra.mxu0 %v289
        %325 = vmatpush.msra.mxu0 %v288
        %326 = vmatpush.msra.mxu0 %v287
        %327 = vmatpush.msra.mxu0 %v286
        %328 = vmatpush.msra.mxu0 %v285
        %329 = vmatpush.msra.mxu0 %v284
        %330 = vmatpush.msra.mxu0 %v283
        %331 = vmatmul.f32.gmra.mxu0 %v280
        %v332 = vpop.f32.mrf.mxu0
        %v333 = vadd.f32 0.0, %v332
        %334 = vdwg.mxu0
        %335 = vmatpush.msra.mxu0 %v314
        %336 = vmatpush.msra.mxu0 %v313
        %337 = vmatpush.msra.mxu0 %v312
        %338 = vmatpush.msra.mxu0 %v311
        %339 = vmatpush.msra.mxu0 %v310
        %340 = vmatpush.msra.mxu0 %v309
        %341 = vmatpush.msra.mxu0 %v308
        %342 = vmatpush.msra.mxu0 %v307
        %343 = vmatpush.msra.mxu0 %v306
        %344 = vmatpush.msra.mxu0 %v305
        %345 = vmatpush.msra.mxu0 %v304
        %346 = vmatpush.msra.mxu0 %v303
        %347 = vmatpush.msra.mxu0 %v302
        %348 = vmatpush.msra.mxu0 %v301
        %349 = vmatpush.msra.mxu0 %v300
        %350 = vmatpush.msra.mxu0 %v299
        %351 = vmatmul.f32.gmra.mxu0 %v281
        %v352 = vpop.f32.mrf.mxu0
        %v353 = vadd.f32 %v333, %v352
        %354 = vdwg.mxu0
        %v355 = vadd.f32 %v282, %v353
        %356 = vst.msk [vmem:[%s215] sm:$0xff] %vm220, %v355
        %v357 = vld [vmem:[%s215] sm:$0xff]
        %v358 = vld [vmem:[%s4] sm:$0x1]
        %v360 = vperm.slane %v358, 0
        %v362 = vadd.f32 %v357, %v360
        %363 = vst.msk [vmem:[%s215] sm:$0xff] %vm220, %v362
        %s364 = sand.u32 %s137, 1
        %s365 = scalar_lea.sflag [#allocation3], %s364
        %s366 = sand.u32 %s137, 1
        %s367 = smul.addr %s366, 8
        %s368 = scalar_lea.vmem [#allocation2], %s367
        // Predicated region
        $region41: #{feed_forward_block.1} parent=39 // pred_check
          %p369 = pneg %p147
        $region42: #{feed_forward_block.1} parent=39 // pred_check_branch
          %371 = sbr.rel (%p369) target = $region44
        $region43: #{feed_forward_block.1} parent=39 // pred_region
          %373 = vsyncadd %s365, 0
          %s374 = smul.addr %s19, 8
          %s375 = scalar_lea.hbm %s5, %s374
          %s377 = sshll.u32 %s368, 4
          %s378 = int_to_ptr.vmem [resolvable:$true] %s377
          %s379 = sshll.u32 %s375, 4
          %s380 = int_to_ptr.hbm [resolvable:$true] %s379
          %382 = dma.vmem_to_hbm [thread:$0]  %s378, 128, %s380, %s365
        $region44: #{feed_forward_block.1} parent=39 // pred_fallthru
          _
      $region40: #{feed_forward_block.1} parent=5 // pred_fallthru
        _
      %p383 = scmp.le.s32.totalorder 2, %s14
      // Predicated region
      $region45: #{feed_forward_block.1} parent=5 // pred_check
        %p384 = pneg %p383
      $region46: #{feed_forward_block.1} parent=5 // pred_check_branch
        %386 = sbr.rel (%p384) target = $region48
      $region47: #{feed_forward_block.1} parent=5 // pred_region
        %s387 = ssub.s32 %s14, 2
        // Predicated region
        $region49: #{feed_forward_block.1} parent=47 // pred_check
          %p388 = pneg %p153
        $region50: #{feed_forward_block.1} parent=47 // pred_check_branch
          %390 = sbr.rel (%p388) target = $region52
        $region51: #{feed_forward_block.1} parent=47 // pred_region
          %s391 = sand.u32 %s138, 1
          %s392 = scalar_lea.sflag [#allocation3], %s391
          %s393 = sand.u32 %s138, 1
          %s394 = smul.addr %s393, 8
          %s395 = scalar_lea.vmem [#allocation2], %s394
          %397 = dma.done %s392, 128
        $region52: #{feed_forward_block.1} parent=47 // pred_fallthru
          _
      $region48: #{feed_forward_block.1} parent=5 // pred_fallthru
        _
    $region6: #{feed_forward_block.1} parent=1 // loop_footer
      %s18 = sadd.s32 1, %s14
    $region7: #{feed_forward_block.1} parent=1 // loop_footer_branch
      %13 = sbr.rel target = $region3
    $region8: #{feed_forward_block.1} parent=1 // loop_exit
      _
    %398 = vsyncpa [#allocation3], 1
    %s399 = scalar_lea.sflag [#allocation3], 1
    %400 = vsyncpa %s399, 1

</llo_original>
